<compile_context>
chip_gen: v7x
topology: tpu7x:2x2x1
jax: 0.10.0
libtpu: 0.0.40
codegen_flags: <defaults>
</compile_context>

<pallas_src>
import functools
import math

import jax
import jax.numpy as jnp
from jax import lax
from jax.experimental import pallas as pl
from jax.experimental.pallas import tpu as pltpu


def _simattn_kernel(qp_ref, kp_ref, v_ref, hr_ref, o_ref,
                    acc_ref, m_ref, li_ref, *, ck, t2, scale):
    """One (batch, T1-tile, T2-chunk) grid step.

    qp_ref : [tm, D]       projected query tile (f32)
    kp_ref : [T2, D]       projected key, resident per batch (f32)
    v_ref  : [T2, D]       value, resident per batch (native dtype)
    hr_ref : [ck, tm, D]   concept-tensor chunk (native dtype)
    o_ref  : [tm, D]       output tile (written at the last chunk)
    acc_ref: [tm, D]  f32  accumulator scratch
    m_ref  : [tm, 1]  f32  softmax row max scratch
    li_ref : [tm, 1]  f32  softmax 1/row-sum scratch
    """
    c = pl.program_id(2)
    n_k = pl.num_programs(2)
    f32 = jnp.float32

    qp = qp_ref[...].astype(f32)                                     # [tm, D]

    @pl.when(c == 0)
    def _init():
        # Full-row softmax stats + the standard p @ value term (one MXU pass).
        kp = kp_ref[...].astype(f32)                                 # [T2, D]
        s = lax.dot_general(qp, kp, (((1,), (1,)), ((), ())),
                            preferred_element_type=f32) * scale      # [tm, T2]
        m = jnp.max(s, axis=-1, keepdims=True)                       # [tm, 1]
        e = jnp.exp(s - m)
        li = 1.0 / jnp.sum(e, axis=-1, keepdims=True)                # [tm, 1]
        m_ref[...] = m
        li_ref[...] = li
        p = e * li                                                   # [tm, T2]
        acc_ref[...] = jnp.dot(p, v_ref[...].astype(f32),
                               preferred_element_type=f32)           # [tm, D]

    m = m_ref[...]
    li = li_ref[...]
    k0 = pl.multiple_of(c * ck, ck)

    def accum(width):
        # Recompute this chunk's slice of p from the resident kp: p_c keeps tm
        # on sublanes, so every column is already laid out for a lane-broadcast
        # against [tm, D] — no transpose, no scratch round trip, no relayout.
        kp_c = kp_ref[pl.ds(k0, width), :].astype(f32)               # [width, D]
        s_c = lax.dot_general(qp, kp_c, (((1,), (1,)), ((), ())),
                              preferred_element_type=f32) * scale    # [tm, width]
        p_c = jnp.exp(s_c - m) * li                                  # [tm, width]
        for j in range(width):                                       # static unroll
            # One hR row at a time: live set ~= one [tm, D] tile + accumulator.
            acc_ref[...] += p_c[:, j:j + 1] * hr_ref[j].astype(f32)

    rem = t2 % ck
    if rem == 0:
        accum(ck)
    else:
        # Statically-sized tail chunk: only the last grid step along the
        # reduction axis processes `rem` rows; no OOB reads are ever consumed.
        @pl.when(c < n_k - 1)
        def _full():
            accum(ck)

        @pl.when(c == n_k - 1)
        def _tail():
            accum(rem)

    @pl.when(c == n_k - 1)
    def _done():
        o_ref[...] = acc_ref[...].astype(o_ref.dtype)


def _vmem_budget(vmem_limit_bytes):
    """Per-generation VMEM request: ~96 MiB on v5e/v6e (128 MiB physical),
    ~48 MiB on v7x (64 MiB per TensorCore)."""
    if vmem_limit_bytes is not None:
        return int(vmem_limit_bytes)
    try:
        cap = int(pltpu.get_tpu_info().vmem_capacity_bytes)
    except Exception:  # pragma: no cover - conservative fallback
        cap = 64 << 20
    return min((3 * cap) // 4, 100 << 20)


def _pick_tiles(T1, T2, D, hr_itemsize, budget,
                tm_target=256, chunk_target_bytes=4 << 20, ck_max=64):
    """Pick (tm, ck): the T1 tile and the T2 chunk of the hR stream.

    Accounts for *all* VMEM consumers (resident kp/v, qp/out tiles, scratches,
    double-buffered hR chunk), not just the hR slab."""
    # --- T1 tile --------------------------------------------------------------
    if T1 <= tm_target:
        tm = T1                                   # full dim -> no 8/128 issue
    else:
        tm = max(16, (tm_target // 16) * 16)      # 16 = bf16 sublane granule

    def other_bytes(tm_):                         # conservative 4 B/elem
        return (2 * 2 * T2 * D * 4                # resident kp + v (2 bufs each)
                + 2 * tm_ * D * 4                 # qp tile
                + 2 * tm_ * D * 4                 # out tile
                + tm_ * D * 4                     # f32 accumulator scratch
                + 2 * tm_ * 128 * 4)              # m / 1-over-l (lane padded)

    while tm > 16 and other_bytes(tm) + 2 * tm * D * hr_itemsize > budget:
        tm = max(16, ((tm // 2) // 16) * 16)

    # --- T2 chunk -------------------------------------------------------------
    per_k = tm * D * hr_itemsize                  # one hR "row" in this tile
    vmem_ck = max(1, (budget - other_bytes(tm)) // (2 * per_k))
    ck = int(min(max(1, chunk_target_bytes // per_k), vmem_ck, T2, ck_max))
    # Prefer a chunk size that divides T2 (skips the tail path) when a
    # not-much-smaller divisor exists; never degenerate to tiny chunks.
    if T2 % ck:
        for d in range(ck, 0, -1):
            if T2 % d == 0:
                if d >= max(4, ck // 2):
                    ck = d
                break
    return tm, ck


def sim_attn(query, key, value, hL, hR, wq, bq, wk, bk, *,
             tm=None, ck=None, vmem_limit_bytes=None):
    """Pallas implementation of SimAttn.forward(sharpening=False, mask=None).

    query: [B, T1, D]; key/value: [B, T2, D]
    hL: [B, T1, T2, D] (unused, kept for signature parity)
    hR: [B, T2, T1, D] (streamed in its native dtype; pass bf16 upstream if
        you want to halve its HBM traffic)
    wq, wk: [D, D] (PyTorch nn.Linear weight, out x in); bq, bk: [D]
    """
    del hL  # unused by concept_attention (matches the PyTorch source)
    B, T1, D = query.shape
    _, T2, _ = key.shape
    assert key.shape == (B, T2, D) and value.shape == (B, T2, D)
    assert hR.shape == (B, T2, T1, D), hR.shape

    f32 = jnp.float32
    # fwQ / fwK: tiny DxD matmuls — once, in plain XLA, outside the grid.
    qp = query.astype(f32) @ wq.T.astype(f32) + bq.astype(f32)
    kp = key.astype(f32) @ wk.T.astype(f32) + bk.astype(f32)

    budget = _vmem_budget(vmem_limit_bytes)
    hr_item = jnp.dtype(hR.dtype).itemsize
    auto_tm, auto_ck = _pick_tiles(T1, T2, D, hr_item, int(0.9 * budget))
    tm = min(T1, tm) if tm is not None else auto_tm
    ck = min(T2, ck) if ck is not None else auto_ck
    assert tm >= 1 and ck >= 1

    n_t1 = pl.cdiv(T1, tm)
    n_k = pl.cdiv(T2, ck)

    kernel = functools.partial(_simattn_kernel, ck=ck, t2=T2,
                               scale=1.0 / math.sqrt(D))

    v_item = jnp.dtype(value.dtype).itemsize
    out_item = jnp.dtype(query.dtype).itemsize
    # kp/v block indices are constant along the inner axes -> fetched once per b.
    cost = pl.CostEstimate(
        flops=int(8 * B * T1 * T2 * D),
        transcendentals=int(2 * B * T1 * T2),
        bytes_accessed=int(hR.size * hr_item
                           + qp.size * 4
                           + B * T2 * D * (4 + v_item)
                           + B * T1 * D * out_item),
    )

    return pl.pallas_call(
        kernel,
        out_shape=jax.ShapeDtypeStruct((B, T1, D), query.dtype),
        grid_spec=pltpu.PrefetchScalarGridSpec(
            num_scalar_prefetch=0,
            grid=(B, n_t1, n_k),
            in_specs=[
                pl.BlockSpec((None, tm, D), lambda b, i, c: (b, i, 0)),        # qp
                pl.BlockSpec((None, T2, D), lambda b, i, c: (b, 0, 0)),        # kp
                pl.BlockSpec((None, T2, D), lambda b, i, c: (b, 0, 0)),        # value
                pl.BlockSpec((None, ck, tm, D), lambda b, i, c: (b, c, i, 0)),  # hR
            ],
            out_specs=pl.BlockSpec((None, tm, D), lambda b, i, c: (b, i, 0)),
            scratch_shapes=[pltpu.VMEM((tm, D), jnp.float32),   # accumulator
                            pltpu.VMEM((tm, 1), jnp.float32),   # row max
                            pltpu.VMEM((tm, 1), jnp.float32)],  # 1 / row sum
        ),
        compiler_params=pltpu.CompilerParams(
            dimension_semantics=("parallel", "parallel", "arbitrary"),
            vmem_limit_bytes=budget),
        cost_estimate=cost,
    )(qp, kp, value, hR)


def ref_forward(query, key, value, hR, wq, bq, wk, bk):
    """Pure-JAX f32 reference matching the PyTorch semantics."""
    q = query @ wq.T + bq
    k = key @ wk.T + bk
    d_k = q.shape[-1]
    s = jnp.einsum("btd,bkd->btk", q, k) / math.sqrt(d_k)
    p = jax.nn.softmax(s, axis=-1)
    return (jnp.einsum("btk,bkd->btd", p, value)
            + jnp.einsum("btk,bktd->btd", p, hR))


if __name__ == "__main__":
    def run_case(B, T1, T2, D, **kw):
        ks = jax.random.split(jax.random.PRNGKey(0), 9)
        query = jax.random.normal(ks[0], (B, T1, D), jnp.float32)
        key_ = jax.random.normal(ks[1], (B, T2, D), jnp.float32)
        value = jax.random.normal(ks[2], (B, T2, D), jnp.float32)
        hL = jax.random.normal(ks[3], (B, T1, T2, D), jnp.float32)
        hR = jax.random.normal(ks[4], (B, T2, T1, D), jnp.float32)
        # deterministic "nn.Linear(d_model, d_model)" parameters
        bound = 1.0 / math.sqrt(D)
        wq = jax.random.uniform(ks[5], (D, D), jnp.float32, -bound, bound)
        bq = jax.random.uniform(ks[6], (D,), jnp.float32, -bound, bound)
        wk = jax.random.uniform(ks[7], (D, D), jnp.float32, -bound, bound)
        bk = jax.random.uniform(ks[8], (D,), jnp.float32, -bound, bound)

        out = jax.block_until_ready(
            sim_attn(query, key_, value, hL, hR, wq, bq, wk, bk, **kw))
        assert out.shape == (B, T1, D)
        ref = ref_forward(query, key_, value, hR, wq, bq, wk, bk)
        err = float(jnp.max(jnp.abs(out - ref)))
        assert err < 2e-2, (B, T1, T2, D, err)
        return err

    # Auto-tiled, evenly divisible shapes.
    run_case(2, 8, 8, 32)
    # Multi T1-tile, multiple T2 chunks plus the statically-sized tail chunk.
    run_case(1, 16, 11, 32, tm=8, ck=4)
    print("KERNEL_OK")
</pallas_src>

<mosaic_0001>
module attributes {stable_mosaic.version = 11 : i64} {
  func.func @_simattn_kernel(%arg0: i32, %arg1: i32, %arg2: i32, %arg3: memref<1x8x32xf32, #tpu.memory_space<vmem>>, %arg4: memref<1x8x32xf32, #tpu.memory_space<vmem>>, %arg5: memref<1x8x32xf32, #tpu.memory_space<vmem>>, %arg6: memref<1x8x8x32xf32, #tpu.memory_space<vmem>>, %arg7: memref<1x8x32xf32, #tpu.memory_space<vmem>>, %arg8: memref<8x32xf32, #tpu.memory_space<vmem>>, %arg9: memref<8x1xf32, #tpu.memory_space<vmem>>, %arg10: memref<8x1xf32, #tpu.memory_space<vmem>>) attributes {dimension_semantics = [#tpu.dimension_semantics<parallel>, #tpu.dimension_semantics<parallel>, #tpu.dimension_semantics<arbitrary>], iteration_bounds = array<i64: 2, 1, 1>, scalar_prefetch = 0 : i64, scratch_operands = 3 : i64, tpu.core_type = #tpu.core_type<tc>, window_params = [{transform_indices = @transform_0, window_bounds = array<i64: 1, 8, 32>}, {transform_indices = @transform_1, window_bounds = array<i64: 1, 8, 32>}, {transform_indices = @transform_2, window_bounds = array<i64: 1, 8, 32>}, {transform_indices = @transform_3, window_bounds = array<i64: 1, 8, 8, 32>}, {transform_indices = @transform_4, window_bounds = array<i64: 1, 8, 32>}]} {
    %c0 = arith.constant 0 : index
    %c0_0 = arith.constant 0 : index
    %c0_1 = arith.constant 0 : index
    %0 = vector.load %arg3[%c0, %c0_0, %c0_1] : memref<1x8x32xf32, #tpu.memory_space<vmem>>, vector<1x8x32xf32>
    %1 = vector.shape_cast %0 : vector<1x8x32xf32> to vector<8x32xf32>
    %c0_i32 = arith.constant 0 : i32
    %2 = arith.cmpi eq, %arg2, %c0_i32 : i32
    %3 = arith.extui %2 : i1 to i32
    %c0_i32_2 = arith.constant 0 : i32
    %4 = arith.cmpi ne, %3, %c0_i32_2 : i32
    scf.if %4 {
      %c0_69 = arith.constant 0 : index
      %c0_70 = arith.constant 0 : index
      %c0_71 = arith.constant 0 : index
      %87 = vector.load %arg4[%c0_69, %c0_70, %c0_71] : memref<1x8x32xf32, #tpu.memory_space<vmem>>, vector<1x8x32xf32>
      %88 = vector.shape_cast %87 : vector<1x8x32xf32> to vector<8x32xf32>
      %cst_72 = arith.constant dense<0.000000e+00> : vector<8x8xf32>
      %89 = tpu.matmul %1, %88, %cst_72 {dimension_numbers = #tpu.dot_dimension_numbers<[1], [1], [0], [0], [0, 0, 1, 0], [], []>} : vector<8x32xf32>, vector<8x32xf32>, vector<8x8xf32> -> vector<8x8xf32>
      %cst_73 = arith.constant 0.176776692 : f32
      %90 = vector.broadcast %cst_73 : f32 to vector<8x8xf32>
      %91 = arith.mulf %89, %90 : vector<8x8xf32>
      %cst_74 = arith.constant dense<0xFF800000> : vector<8xf32>
      %92 = vector.multi_reduction <maximumf>, %91, %cst_74 [1] : vector<8x8xf32> to vector<8xf32>
      %93 = vector.shape_cast %92 : vector<8xf32> to vector<8x1xf32>
      %94 = vector.broadcast %93 : vector<8x1xf32> to vector<8x8xf32>
      %95 = arith.subf %91, %94 : vector<8x8xf32>
      %96 = math.exp %95 : vector<8x8xf32>
      %cst_75 = arith.constant dense<0.000000e+00> : vector<8xf32>
      %97 = vector.multi_reduction <add>, %96, %cst_75 [1] : vector<8x8xf32> to vector<8xf32>
      %98 = vector.shape_cast %97 : vector<8xf32> to vector<8x1xf32>
      %cst_76 = arith.constant 1.000000e+00 : f32
      %99 = vector.broadcast %cst_76 : f32 to vector<8x1xf32>
      %100 = arith.divf %99, %98 : vector<8x1xf32>
      %c0_77 = arith.constant 0 : index
      %c0_78 = arith.constant 0 : index
      %101 = vector.load %arg9[%c0_77, %c0_78] : memref<8x1xf32, #tpu.memory_space<vmem>>, vector<8x1xf32>
      tpu.vector_store %arg9[%c0_77, %c0_78], %93 {strides = array<i32>} : memref<8x1xf32, #tpu.memory_space<vmem>>, vector<8x1xf32>,
      %c0_79 = arith.constant 0 : index
      %c0_80 = arith.constant 0 : index
      %102 = vector.load %arg10[%c0_79, %c0_80] : memref<8x1xf32, #tpu.memory_space<vmem>>, vector<8x1xf32>
      tpu.vector_store %arg10[%c0_79, %c0_80], %100 {strides = array<i32>} : memref<8x1xf32, #tpu.memory_space<vmem>>, vector<8x1xf32>,
      %103 = vector.broadcast %100 : vector<8x1xf32> to vector<8x8xf32>
      %104 = arith.mulf %96, %103 : vector<8x8xf32>
      %c0_81 = arith.constant 0 : index
      %c0_82 = arith.constant 0 : index
      %c0_83 = arith.constant 0 : index
      %105 = vector.load %arg5[%c0_81, %c0_82, %c0_83] : memref<1x8x32xf32, #tpu.memory_space<vmem>>, vector<1x8x32xf32>
      %106 = vector.shape_cast %105 : vector<1x8x32xf32> to vector<8x32xf32>
      %cst_84 = arith.constant dense<0.000000e+00> : vector<8x32xf32>
      %107 = tpu.matmul %104, %106, %cst_84 {dimension_numbers = #tpu.dot_dimension_numbers<[1], [0], [0], [1], [0, 0, 1, 1], [], []>} : vector<8x8xf32>, vector<8x32xf32>, vector<8x32xf32> -> vector<8x32xf32>
      %c0_85 = arith.constant 0 : index
      %c0_86 = arith.constant 0 : index
      %108 = vector.load %arg8[%c0_85, %c0_86] : memref<8x32xf32, #tpu.memory_space<vmem>>, vector<8x32xf32>
      tpu.vector_store %arg8[%c0_85, %c0_86], %107 {strides = array<i32>} : memref<8x32xf32, #tpu.memory_space<vmem>>, vector<8x32xf32>,
    } else {
    }
    %c0_3 = arith.constant 0 : index
    %c0_4 = arith.constant 0 : index
    %5 = vector.load %arg9[%c0_3, %c0_4] : memref<8x1xf32, #tpu.memory_space<vmem>>, vector<8x1xf32>
    %c0_5 = arith.constant 0 : index
    %c0_6 = arith.constant 0 : index
    %6 = vector.load %arg10[%c0_5, %c0_6] : memref<8x1xf32, #tpu.memory_space<vmem>>, vector<8x1xf32>
    %c8_i32 = arith.constant 8 : i32
    %7 = arith.muli %arg2, %c8_i32 : i32
    %8 = tpu.assume_multiple %7, 8 : i32
    %c0_7 = arith.constant 0 : index
    %9 = arith.index_cast %8 : i32 to index
    %c0_8 = arith.constant 0 : index
    %10 = vector.load %arg4[%c0_7, %9, %c0_8] : memref<1x8x32xf32, #tpu.memory_space<vmem>>, vector<1x8x32xf32>
    %11 = vector.shape_cast %10 : vector<1x8x32xf32> to vector<8x32xf32>
    %cst = arith.constant dense<0.000000e+00> : vector<8x8xf32>
    %12 = tpu.matmul %1, %11, %cst {dimension_numbers = #tpu.dot_dimension_numbers<[1], [1], [0], [0], [0, 0, 1, 0], [], []>} : vector<8x32xf32>, vector<8x32xf32>, vector<8x8xf32> -> vector<8x8xf32>
    %cst_9 = arith.constant 0.176776692 : f32
    %13 = vector.broadcast %cst_9 : f32 to vector<8x8xf32>
    %14 = arith.mulf %12, %13 : vector<8x8xf32>
    %15 = vector.broadcast %5 : vector<8x1xf32> to vector<8x8xf32>
    %16 = arith.subf %14, %15 : vector<8x8xf32>
    %17 = math.exp %16 : vector<8x8xf32>
    %18 = vector.broadcast %6 : vector<8x1xf32> to vector<8x8xf32>
    %19 = arith.mulf %17, %18 : vector<8x8xf32>
    %c0_10 = arith.constant 0 : index
    %c0_11 = arith.constant 0 : index
    %20 = vector.load %arg8[%c0_10, %c0_11] : memref<8x32xf32, #tpu.memory_space<vmem>>, vector<8x32xf32>
    %21 = vector.extract_strided_slice %19 {offsets = [0, 0], sizes = [8, 1], strides = [1, 1]} : vector<8x8xf32> to vector<8x1xf32>
    %c0_12 = arith.constant 0 : index
    %c0_13 = arith.constant 0 : index
    %c0_14 = arith.constant 0 : index
    %c0_15 = arith.constant 0 : index
    %22 = vector.load %arg6[%c0_12, %c0_13, %c0_14, %c0_15] : memref<1x8x8x32xf32, #tpu.memory_space<vmem>>, vector<1x1x8x32xf32>
    %23 = vector.shape_cast %22 : vector<1x1x8x32xf32> to vector<8x32xf32>
    %24 = vector.broadcast %21 : vector<8x1xf32> to vector<8x32xf32>
    %25 = arith.mulf %24, %23 : vector<8x32xf32>
    %26 = arith.addf %20, %25 : vector<8x32xf32>
    %c0_16 = arith.constant 0 : index
    %c0_17 = arith.constant 0 : index
    %27 = vector.load %arg8[%c0_16, %c0_17] : memref<8x32xf32, #tpu.memory_space<vmem>>, vector<8x32xf32>
    tpu.vector_store %arg8[%c0_16, %c0_17], %26 {strides = array<i32>} : memref<8x32xf32, #tpu.memory_space<vmem>>, vector<8x32xf32>,
    %c0_18 = arith.constant 0 : index
    %c0_19 = arith.constant 0 : index
    %28 = vector.load %arg8[%c0_18, %c0_19] : memref<8x32xf32, #tpu.memory_space<vmem>>, vector<8x32xf32>
    %29 = vector.extract_strided_slice %19 {offsets = [0, 1], sizes = [8, 1], strides = [1, 1]} : vector<8x8xf32> to vector<8x1xf32>
    %c0_20 = arith.constant 0 : index
    %c1 = arith.constant 1 : index
    %c0_21 = arith.constant 0 : index
    %c0_22 = arith.constant 0 : index
    %30 = vector.load %arg6[%c0_20, %c1, %c0_21, %c0_22] : memref<1x8x8x32xf32, #tpu.memory_space<vmem>>, vector<1x1x8x32xf32>
    %31 = vector.shape_cast %30 : vector<1x1x8x32xf32> to vector<8x32xf32>
    %32 = vector.broadcast %29 : vector<8x1xf32> to vector<8x32xf32>
    %33 = arith.mulf %32, %31 : vector<8x32xf32>
    %34 = arith.addf %28, %33 : vector<8x32xf32>
    %c0_23 = arith.constant 0 : index
    %c0_24 = arith.constant 0 : index
    %35 = vector.load %arg8[%c0_23, %c0_24] : memref<8x32xf32, #tpu.memory_space<vmem>>, vector<8x32xf32>
    tpu.vector_store %arg8[%c0_23, %c0_24], %34 {strides = array<i32>} : memref<8x32xf32, #tpu.memory_space<vmem>>, vector<8x32xf32>,
    %c0_25 = arith.constant 0 : index
    %c0_26 = arith.constant 0 : index
    %36 = vector.load %arg8[%c0_25, %c0_26] : memref<8x32xf32, #tpu.memory_space<vmem>>, vector<8x32xf32>
    %37 = vector.extract_strided_slice %19 {offsets = [0, 2], sizes = [8, 1], strides = [1, 1]} : vector<8x8xf32> to vector<8x1xf32>
    %c0_27 = arith.constant 0 : index
    %c2 = arith.constant 2 : index
    %c0_28 = arith.constant 0 : index
    %c0_29 = arith.constant 0 : index
    %38 = vector.load %arg6[%c0_27, %c2, %c0_28, %c0_29] : memref<1x8x8x32xf32, #tpu.memory_space<vmem>>, vector<1x1x8x32xf32>
    %39 = vector.shape_cast %38 : vector<1x1x8x32xf32> to vector<8x32xf32>
    %40 = vector.broadcast %37 : vector<8x1xf32> to vector<8x32xf32>
    %41 = arith.mulf %40, %39 : vector<8x32xf32>
    %42 = arith.addf %36, %41 : vector<8x32xf32>
    %c0_30 = arith.constant 0 : index
    %c0_31 = arith.constant 0 : index
    %43 = vector.load %arg8[%c0_30, %c0_31] : memref<8x32xf32, #tpu.memory_space<vmem>>, vector<8x32xf32>
    tpu.vector_store %arg8[%c0_30, %c0_31], %42 {strides = array<i32>} : memref<8x32xf32, #tpu.memory_space<vmem>>, vector<8x32xf32>,
    %c0_32 = arith.constant 0 : index
    %c0_33 = arith.constant 0 : index
    %44 = vector.load %arg8[%c0_32, %c0_33] : memref<8x32xf32, #tpu.memory_space<vmem>>, vector<8x32xf32>
    %45 = vector.extract_strided_slice %19 {offsets = [0, 3], sizes = [8, 1], strides = [1, 1]} : vector<8x8xf32> to vector<8x1xf32>
    %c0_34 = arith.constant 0 : index
    %c3 = arith.constant 3 : index
    %c0_35 = arith.constant 0 : index
    %c0_36 = arith.constant 0 : index
    %46 = vector.load %arg6[%c0_34, %c3, %c0_35, %c0_36] : memref<1x8x8x32xf32, #tpu.memory_space<vmem>>, vector<1x1x8x32xf32>
    %47 = vector.shape_cast %46 : vector<1x1x8x32xf32> to vector<8x32xf32>
    %48 = vector.broadcast %45 : vector<8x1xf32> to vector<8x32xf32>
    %49 = arith.mulf %48, %47 : vector<8x32xf32>
    %50 = arith.addf %44, %49 : vector<8x32xf32>
    %c0_37 = arith.constant 0 : index
    %c0_38 = arith.constant 0 : index
    %51 = vector.load %arg8[%c0_37, %c0_38] : memref<8x32xf32, #tpu.memory_space<vmem>>, vector<8x32xf32>
    tpu.vector_store %arg8[%c0_37, %c0_38], %50 {strides = array<i32>} : memref<8x32xf32, #tpu.memory_space<vmem>>, vector<8x32xf32>,
    %c0_39 = arith.constant 0 : index
    %c0_40 = arith.constant 0 : index
    %52 = vector.load %arg8[%c0_39, %c0_40] : memref<8x32xf32, #tpu.memory_space<vmem>>, vector<8x32xf32>
    %53 = vector.extract_strided_slice %19 {offsets = [0, 4], sizes = [8, 1], strides = [1, 1]} : vector<8x8xf32> to vector<8x1xf32>
    %c0_41 = arith.constant 0 : index
    %c4 = arith.constant 4 : index
    %c0_42 = arith.constant 0 : index
    %c0_43 = arith.constant 0 : index
    %54 = vector.load %arg6[%c0_41, %c4, %c0_42, %c0_43] : memref<1x8x8x32xf32, #tpu.memory_space<vmem>>, vector<1x1x8x32xf32>
    %55 = vector.shape_cast %54 : vector<1x1x8x32xf32> to vector<8x32xf32>
    %56 = vector.broadcast %53 : vector<8x1xf32> to vector<8x32xf32>
    %57 = arith.mulf %56, %55 : vector<8x32xf32>
    %58 = arith.addf %52, %57 : vector<8x32xf32>
    %c0_44 = arith.constant 0 : index
    %c0_45 = arith.constant 0 : index
    %59 = vector.load %arg8[%c0_44, %c0_45] : memref<8x32xf32, #tpu.memory_space<vmem>>, vector<8x32xf32>
    tpu.vector_store %arg8[%c0_44, %c0_45], %58 {strides = array<i32>} : memref<8x32xf32, #tpu.memory_space<vmem>>, vector<8x32xf32>,
    %c0_46 = arith.constant 0 : index
    %c0_47 = arith.constant 0 : index
    %60 = vector.load %arg8[%c0_46, %c0_47] : memref<8x32xf32, #tpu.memory_space<vmem>>, vector<8x32xf32>
    %61 = vector.extract_strided_slice %19 {offsets = [0, 5], sizes = [8, 1], strides = [1, 1]} : vector<8x8xf32> to vector<8x1xf32>
    %c0_48 = arith.constant 0 : index
    %c5 = arith.constant 5 : index
    %c0_49 = arith.constant 0 : index
    %c0_50 = arith.constant 0 : index
    %62 = vector.load %arg6[%c0_48, %c5, %c0_49, %c0_50] : memref<1x8x8x32xf32, #tpu.memory_space<vmem>>, vector<1x1x8x32xf32>
    %63 = vector.shape_cast %62 : vector<1x1x8x32xf32> to vector<8x32xf32>
    %64 = vector.broadcast %61 : vector<8x1xf32> to vector<8x32xf32>
    %65 = arith.mulf %64, %63 : vector<8x32xf32>
    %66 = arith.addf %60, %65 : vector<8x32xf32>
    %c0_51 = arith.constant 0 : index
    %c0_52 = arith.constant 0 : index
    %67 = vector.load %arg8[%c0_51, %c0_52] : memref<8x32xf32, #tpu.memory_space<vmem>>, vector<8x32xf32>
    tpu.vector_store %arg8[%c0_51, %c0_52], %66 {strides = array<i32>} : memref<8x32xf32, #tpu.memory_space<vmem>>, vector<8x32xf32>,
    %c0_53 = arith.constant 0 : index
    %c0_54 = arith.constant 0 : index
    %68 = vector.load %arg8[%c0_53, %c0_54] : memref<8x32xf32, #tpu.memory_space<vmem>>, vector<8x32xf32>
    %69 = vector.extract_strided_slice %19 {offsets = [0, 6], sizes = [8, 1], strides = [1, 1]} : vector<8x8xf32> to vector<8x1xf32>
    %c0_55 = arith.constant 0 : index
    %c6 = arith.constant 6 : index
    %c0_56 = arith.constant 0 : index
    %c0_57 = arith.constant 0 : index
    %70 = vector.load %arg6[%c0_55, %c6, %c0_56, %c0_57] : memref<1x8x8x32xf32, #tpu.memory_space<vmem>>, vector<1x1x8x32xf32>
    %71 = vector.shape_cast %70 : vector<1x1x8x32xf32> to vector<8x32xf32>
    %72 = vector.broadcast %69 : vector<8x1xf32> to vector<8x32xf32>
    %73 = arith.mulf %72, %71 : vector<8x32xf32>
    %74 = arith.addf %68, %73 : vector<8x32xf32>
    %c0_58 = arith.constant 0 : index
    %c0_59 = arith.constant 0 : index
    %75 = vector.load %arg8[%c0_58, %c0_59] : memref<8x32xf32, #tpu.memory_space<vmem>>, vector<8x32xf32>
    tpu.vector_store %arg8[%c0_58, %c0_59], %74 {strides = array<i32>} : memref<8x32xf32, #tpu.memory_space<vmem>>, vector<8x32xf32>,
    %c0_60 = arith.constant 0 : index
    %c0_61 = arith.constant 0 : index
    %76 = vector.load %arg8[%c0_60, %c0_61] : memref<8x32xf32, #tpu.memory_space<vmem>>, vector<8x32xf32>
    %77 = vector.extract_strided_slice %19 {offsets = [0, 7], sizes = [8, 1], strides = [1, 1]} : vector<8x8xf32> to vector<8x1xf32>
    %c0_62 = arith.constant 0 : index
    %c7 = arith.constant 7 : index
    %c0_63 = arith.constant 0 : index
    %c0_64 = arith.constant 0 : index
    %78 = vector.load %arg6[%c0_62, %c7, %c0_63, %c0_64] : memref<1x8x8x32xf32, #tpu.memory_space<vmem>>, vector<1x1x8x32xf32>
    %79 = vector.shape_cast %78 : vector<1x1x8x32xf32> to vector<8x32xf32>
    %80 = vector.broadcast %77 : vector<8x1xf32> to vector<8x32xf32>
    %81 = arith.mulf %80, %79 : vector<8x32xf32>
    %82 = arith.addf %76, %81 : vector<8x32xf32>
    %c0_65 = arith.constant 0 : index
    %c0_66 = arith.constant 0 : index
    %83 = vector.load %arg8[%c0_65, %c0_66] : memref<8x32xf32, #tpu.memory_space<vmem>>, vector<8x32xf32>
    tpu.vector_store %arg8[%c0_65, %c0_66], %82 {strides = array<i32>} : memref<8x32xf32, #tpu.memory_space<vmem>>, vector<8x32xf32>,
    %c0_i32_67 = arith.constant 0 : i32
    %84 = arith.cmpi eq, %arg2, %c0_i32_67 : i32
    %85 = arith.extui %84 : i1 to i32
    %c0_i32_68 = arith.constant 0 : i32
    %86 = arith.cmpi ne, %85, %c0_i32_68 : i32
    scf.if %86 {
      %c0_69 = arith.constant 0 : index
      %c0_70 = arith.constant 0 : index
      %87 = vector.load %arg8[%c0_69, %c0_70] : memref<8x32xf32, #tpu.memory_space<vmem>>, vector<8x32xf32>
      %c0_71 = arith.constant 0 : index
      %c0_72 = arith.constant 0 : index
      %c0_73 = arith.constant 0 : index
      %88 = vector.load %arg7[%c0_71, %c0_72, %c0_73] : memref<1x8x32xf32, #tpu.memory_space<vmem>>, vector<1x8x32xf32>
      %89 = vector.shape_cast %88 : vector<1x8x32xf32> to vector<8x32xf32>
      %90 = vector.shape_cast %87 : vector<8x32xf32> to vector<1x8x32xf32>
      tpu.vector_store %arg7[%c0_71, %c0_72, %c0_73], %90 {strides = array<i32>} : memref<1x8x32xf32, #tpu.memory_space<vmem>>, vector<1x8x32xf32>,
    } else {
    }
    return
  }
  func.func @transform_0(%arg0: i32, %arg1: i32, %arg2: i32) -> (i32, i32, i32) {
    %c0_i32 = arith.constant 0 : i32
    %c0_i32_0 = arith.constant 0 : i32
    return %arg0, %arg1, %c0_i32 : i32, i32, i32
  }
  func.func @transform_1(%arg0: i32, %arg1: i32, %arg2: i32) -> (i32, i32, i32) {
    %c0_i32 = arith.constant 0 : i32
    %c0_i32_0 = arith.constant 0 : i32
    %c0_i32_1 = arith.constant 0 : i32
    return %arg0, %c0_i32, %c0_i32_0 : i32, i32, i32
  }
  func.func @transform_2(%arg0: i32, %arg1: i32, %arg2: i32) -> (i32, i32, i32) {
    %c0_i32 = arith.constant 0 : i32
    %c0_i32_0 = arith.constant 0 : i32
    %c0_i32_1 = arith.constant 0 : i32
    return %arg0, %c0_i32, %c0_i32_0 : i32, i32, i32
  }
  func.func @transform_3(%arg0: i32, %arg1: i32, %arg2: i32) -> (i32, i32, i32, i32) {
    %c0_i32 = arith.constant 0 : i32
    %c0_i32_0 = arith.constant 0 : i32
    return %arg0, %arg2, %arg1, %c0_i32 : i32, i32, i32, i32
  }
  func.func @transform_4(%arg0: i32, %arg1: i32, %arg2: i32) -> (i32, i32, i32) {
    %c0_i32 = arith.constant 0 : i32
    %c0_i32_0 = arith.constant 0 : i32
    return %arg0, %arg1, %c0_i32 : i32, i32, i32
  }
}

</mosaic_0001>

<llo_original>
// kernel: tpu_custom_call.1
$region0: #{tpu_custom_call.1}
  #allocation0 [shape = 'u32[]', space=smem, size = 0x4, offset = 0x4, fixed_abs, tag = 'smem constant byte address 0x4 - core index']
  #allocation1 [shape = 'u32[144,128]{1,0:T(1,128)}', space=vmem, size = 0x12000, scoped, tag = 'internal scratch']
  #allocation2 [shape = 'f32[8,32]{1,0:T(8,128)}', space=vmem, size = 0x1000, scoped, tag = 'scratch operand']
  #allocation3 [shape = 'f32[8,1]{1,0:T(8,128)}', space=vmem, size = 0x1000, scoped, tag = 'scratch operand']
  #allocation4 [shape = 'f32[8,1]{1,0:T(8,128)}', space=vmem, size = 0x1000, scoped, tag = 'scratch operand']
  %s0 = inlined_call_operand.hbm [shape: f32[2,8,32], index: 0, kind: input, shape index: {}]
  %s1 = inlined_call_operand.hbm [shape: f32[2,8,32], index: 1, kind: input, shape index: {}]
  %s2 = inlined_call_operand.hbm [shape: f32[2,8,32], index: 2, kind: input, shape index: {}]
  %s3 = inlined_call_operand.hbm [shape: f32[2,8,8,32], index: 3, kind: input, shape index: {}]
  %s4 = inlined_call_operand.hbm [shape: f32[2,8,32], index: 4, kind: output, shape index: {}]
  %s5 = sld [smem:[#allocation0]]
  $region73: #{tpu_custom_call.1} parent=0
    _
  %s7 = ssub.s32 1, %s5
  %s8 = scalar_select 0, %s7, %s5
  $region1: #{tpu_custom_call.1} parent=0
    #allocation5 [shape = 'u8[8192]{0}', space=vmem, size = 0x2000, scoped, tag = 'input window, operand 0']
    #allocation6 [shape = 's32[2]{0}', space=sflag, size = 0x8, scoped, tag = 'scoped memory for tpu_custom_call.1']
    #allocation7 [shape = 's32[2]{0}', space=sflag, size = 0x8, scoped, tag = 'scoped memory for tpu_custom_call.1']
    #allocation8 [shape = 'u8[8192]{0}', space=vmem, size = 0x2000, scoped, tag = 'input window, operand 1']
    #allocation9 [shape = 's32[2]{0}', space=sflag, size = 0x8, scoped, tag = 'scoped memory for tpu_custom_call.1']
    #allocation10 [shape = 'u8[8192]{0}', space=vmem, size = 0x2000, scoped, tag = 'input window, operand 2']
    #allocation11 [shape = 'u8[65536]{0}', space=vmem, size = 0x10000, scoped, tag = 'input window, operand 3']
    #allocation12 [shape = 's32[2]{0}', space=sflag, size = 0x8, scoped, tag = 'scoped memory for tpu_custom_call.1']
    #allocation13 [shape = 'u8[8192]{0}', space=vmem, size = 0x2000, scoped, tag = 'output window, operand 0']
    %9 = vsyncpa [#allocation6], 0
    %s10 = scalar_lea.sflag [#allocation6], 1
    %11 = vsyncpa %s10, 0
    %12 = vsyncpa [#allocation9], 0
    %s13 = scalar_lea.sflag [#allocation9], 1
    %14 = vsyncpa %s13, 0
    %15 = vsyncpa [#allocation12], 0
    %s16 = scalar_lea.sflag [#allocation12], 1
    %17 = vsyncpa %s16, 0
    %18 = vsyncpa [#allocation7], 0
    %s19 = scalar_lea.sflag [#allocation7], 1
    %20 = vsyncpa %s19, 0
    loop: start=0, step=1, limit=4
    $region2: #{tpu_custom_call.1} parent=1 // loop_pre_header
      _
    $region3: #{tpu_custom_call.1} parent=1 // loop_header
      %s22 = sphi 0, %s26
      %p23 = scmp.ge.s32.totalorder %s22, 4
      %s29 = sphi 0, %s48
      %s30 = sphi 0, %s44
      %s31 = sphi 0, %s40
      %s32 = sphi 0, %s29
      %s33 = sphi 0, %s30
      %s34 = sphi 0, %s31
      %s35 = sphi 0, %s32
      %s36 = sphi 0, %s33
      %s37 = sphi 0, %s34
      %s53 = sphi 0, %s55
      %s56 = sphi 0, %s53
      %s57 = sphi 0, %s56
      %s73 = sphi 0, %s57
      %s79 = sphi 0, %s81
      %s82 = sphi 0, %s79
      %s83 = sphi 0, %s82
      %s99 = sphi 0, %s83
      %s105 = sphi 0, %s107
      %s108 = sphi 0, %s105
      %s109 = sphi 0, %s108
      %s125 = sphi 0, %s109
      %s135 = sphi 0, %s137
      %s138 = sphi 0, %s135
      %s139 = sphi 0, %s138
      %s155 = sphi 0, %s139
      %s163 = sphi 0, %s165
      %s166 = sphi 0, %s163
      %s167 = sphi 0, %s166
      %s183 = sphi 0, %s167
    $region4: #{tpu_custom_call.1} parent=1 // loop_header_branch
      %25 = sbr.rel (%p23) target = $region8
    $region5: #{tpu_custom_call.1} parent=1 // loop_body
      %s27 = ssub.s32 %s22, 1
      %s28 = ssub.s32 %s22, 2
      %s38 = sadd.s32 1, %s31
      %p39 = scmp.ge.s32.totalorder %s38, 1
      %s40 = scalar_select %p39, 0, %s38
      %s41 = sadd.s32 1, %s30
      %s42 = scalar_select %p39, %s41, %s30
      %p43 = scmp.ge.s32.totalorder %s42, 1
      %s44 = scalar_select %p43, 0, %s42
      %s45 = sadd.s32 1, %s29
      %s46 = scalar_select %p43, %s45, %s29
      %p47 = scmp.ge.s32.totalorder %s46, 2
      %s48 = scalar_select %p47, 0, %s46
      %s49 = ssub.s32 %s29, %s48
      %s50 = ssub.s32 %s30, %s44
      %s51 = sor.u32 %s49, %s50
      %p52 = scmp.eq.s32.totalorder %s51, 0
      %s54 = sadd.s32 %s53, 1
      %s55 = scalar_select %p52, %s53, %s54
      %p58 = pneg %p52
      %p59 = scmp.eq.s32.totalorder %s22, 1
      %p60 = por %p58, %p59
      %p61 = scmp.ne.s32.totalorder %s53, %s56
      %p62 = scmp.eq.s32.totalorder %s22, 0
      %p63 = por %p61, %p62
      %p64 = scmp.ne.s32.totalorder %s53, %s56
      %p65 = scmp.eq.s32.totalorder %s27, 1
      %p66 = por %p64, %p65
      %p67 = scmp.ne.s32.totalorder %s56, %s57
      %p68 = scmp.eq.s32.totalorder %s27, 0
      %p69 = por %p67, %p68
      %p70 = scmp.ne.s32.totalorder %s56, %s57
      %p71 = scmp.eq.s32.totalorder %s28, 1
      %p72 = por %p70, %p71
      %p74 = scmp.ne.s32.totalorder %s57, %s73
      %p75 = scmp.eq.s32.totalorder %s28, 0
      %p76 = por %p74, %p75
      %s77 = ssub.s32 %s29, %s48
      %p78 = scmp.eq.s32.totalorder %s77, 0
      %s80 = sadd.s32 %s79, 1
      %s81 = scalar_select %p78, %s79, %s80
      %p84 = pneg %p78
      %p85 = scmp.eq.s32.totalorder %s22, 1
      %p86 = por %p84, %p85
      %p87 = scmp.ne.s32.totalorder %s79, %s82
      %p88 = scmp.eq.s32.totalorder %s22, 0
      %p89 = por %p87, %p88
      %p90 = scmp.ne.s32.totalorder %s79, %s82
      %p91 = scmp.eq.s32.totalorder %s27, 1
      %p92 = por %p90, %p91
      %p93 = scmp.ne.s32.totalorder %s82, %s83
      %p94 = scmp.eq.s32.totalorder %s27, 0
      %p95 = por %p93, %p94
      %p96 = scmp.ne.s32.totalorder %s82, %s83
      %p97 = scmp.eq.s32.totalorder %s28, 1
      %p98 = por %p96, %p97
      %p100 = scmp.ne.s32.totalorder %s83, %s99
      %p101 = scmp.eq.s32.totalorder %s28, 0
      %p102 = por %p100, %p101
      %s103 = ssub.s32 %s29, %s48
      %p104 = scmp.eq.s32.totalorder %s103, 0
      %s106 = sadd.s32 %s105, 1
      %s107 = scalar_select %p104, %s105, %s106
      %p110 = pneg %p104
      %p111 = scmp.eq.s32.totalorder %s22, 1
      %p112 = por %p110, %p111
      %p113 = scmp.ne.s32.totalorder %s105, %s108
      %p114 = scmp.eq.s32.totalorder %s22, 0
      %p115 = por %p113, %p114
      %p116 = scmp.ne.s32.totalorder %s105, %s108
      %p117 = scmp.eq.s32.totalorder %s27, 1
      %p118 = por %p116, %p117
      %p119 = scmp.ne.s32.totalorder %s108, %s109
      %p120 = scmp.eq.s32.totalorder %s27, 0
      %p121 = por %p119, %p120
      %p122 = scmp.ne.s32.totalorder %s108, %s109
      %p123 = scmp.eq.s32.totalorder %s28, 1
      %p124 = por %p122, %p123
      %p126 = scmp.ne.s32.totalorder %s109, %s125
      %p127 = scmp.eq.s32.totalorder %s28, 0
      %p128 = por %p126, %p127
      %s129 = ssub.s32 %s29, %s48
      %s130 = ssub.s32 %s31, %s40
      %s131 = sor.u32 %s129, %s130
      %s132 = ssub.s32 %s30, %s44
      %s133 = sor.u32 %s131, %s132
      %p134 = scmp.eq.s32.totalorder %s133, 0
      %s136 = sadd.s32 %s135, 1
      %s137 = scalar_select %p134, %s135, %s136
      %p140 = pneg %p134
      %p141 = scmp.eq.s32.totalorder %s22, 1
      %p142 = por %p140, %p141
      %p143 = scmp.ne.s32.totalorder %s135, %s138
      %p144 = scmp.eq.s32.totalorder %s22, 0
      %p145 = por %p143, %p144
      %p146 = scmp.ne.s32.totalorder %s135, %s138
      %p147 = scmp.eq.s32.totalorder %s27, 1
      %p148 = por %p146, %p147
      %p149 = scmp.ne.s32.totalorder %s138, %s139
      %p150 = scmp.eq.s32.totalorder %s27, 0
      %p151 = por %p149, %p150
      %p152 = scmp.ne.s32.totalorder %s138, %s139
      %p153 = scmp.eq.s32.totalorder %s28, 1
      %p154 = por %p152, %p153
      %p156 = scmp.ne.s32.totalorder %s139, %s155
      %p157 = scmp.eq.s32.totalorder %s28, 0
      %p158 = por %p156, %p157
      %s159 = ssub.s32 %s29, %s48
      %s160 = ssub.s32 %s30, %s44
      %s161 = sor.u32 %s159, %s160
      %p162 = scmp.eq.s32.totalorder %s161, 0
      %s164 = sadd.s32 %s163, 1
      %s165 = scalar_select %p162, %s163, %s164
      %p168 = pneg %p162
      %p169 = scmp.eq.s32.totalorder %s22, 1
      %p170 = por %p168, %p169
      %p171 = scmp.ne.s32.totalorder %s163, %s166
      %p172 = scmp.eq.s32.totalorder %s22, 0
      %p173 = por %p171, %p172
      %p174 = scmp.ne.s32.totalorder %s163, %s166
      %p175 = scmp.eq.s32.totalorder %s27, 1
      %p176 = por %p174, %p175
      %p177 = scmp.ne.s32.totalorder %s166, %s167
      %p178 = scmp.eq.s32.totalorder %s27, 0
      %p179 = por %p177, %p178
      %p180 = scmp.ne.s32.totalorder %s166, %s167
      %p181 = scmp.eq.s32.totalorder %s28, 1
      %p182 = por %p180, %p181
      %p184 = scmp.ne.s32.totalorder %s167, %s183
      %p185 = scmp.eq.s32.totalorder %s28, 0
      %p186 = por %p184, %p185
      %p187 = scmp.le.s32.totalorder 1, %s22
      %p188 = scmp.lt.s32.totalorder %s22, 3
      %p189 = pnand %p187, %p188
      %p190 = pneg %p189
      // Predicated region
      $region9: #{tpu_custom_call.1} parent=5 // pred_check
        _
      $region10: #{tpu_custom_call.1} parent=5 // pred_check_branch
        %192 = sbr.rel (%p189) target = $region12
      $region11: #{tpu_custom_call.1} parent=5 // pred_region
        %s193 = ssub.s32 %s22, 1
      $region12: #{tpu_custom_call.1} parent=5 // pred_fallthru
        _
      %p194 = scmp.lt.s32.totalorder %s22, 2
      // Predicated region
      $region13: #{tpu_custom_call.1} parent=5 // pred_check
        %p195 = pneg %p194
      $region14: #{tpu_custom_call.1} parent=5 // pred_check_branch
        %197 = sbr.rel (%p195) target = $region16
      $region15: #{tpu_custom_call.1} parent=5 // pred_region
        // Predicated region
        $region17: #{tpu_custom_call.1} parent=15 // pred_check
          %p198 = pneg %p63
        $region18: #{tpu_custom_call.1} parent=15 // pred_check_branch
          %200 = sbr.rel (%p198) target = $region20
        $region19: #{tpu_custom_call.1} parent=15 // pred_region
          %s201 = sand.u32 %s53, 1
          %s202 = scalar_lea.sflag [#allocation6], %s201
          %s203 = sand.u32 %s53, 1
          %s204 = smul.addr %s203, 8
          %s205 = scalar_lea.vmem [#allocation5], %s204
          %s207 = ssub.s32 128, 128
          %208 = vsyncadd %s202, %s207
          %s209 = sadd.s32 %s30, %s29
          %s210 = smul.addr %s209, 128
          %s211 = scalar_lea.hbm %s0, %s210
          %s213 = sshll.u32 %s205, 4
          %s214 = int_to_ptr.vmem [resolvable:$true] %s213
          %216 = dma.hbm_to_vmem [thread:$0]  %s211, 128, %s214, %s202
        $region20: #{tpu_custom_call.1} parent=15 // pred_fallthru
          _
        // Predicated region
        $region21: #{tpu_custom_call.1} parent=15 // pred_check
          %p217 = pneg %p89
        $region22: #{tpu_custom_call.1} parent=15 // pred_check_branch
          %219 = sbr.rel (%p217) target = $region24
        $region23: #{tpu_custom_call.1} parent=15 // pred_region
          %s220 = sand.u32 %s22, 1
          %s221 = scalar_lea.sflag [#allocation9], %s220
          %s222 = sand.u32 %s79, 1
          %s223 = smul.addr %s222, 8
          %s224 = scalar_lea.vmem [#allocation8], %s223
          %s226 = ssub.s32 128, 128
          %227 = vsyncadd %s221, %s226
          %s228 = smul.addr %s29, 128
          %s229 = scalar_lea.hbm %s1, %s228
          %s231 = sshll.u32 %s224, 4
          %s232 = int_to_ptr.vmem [resolvable:$true] %s231
          %234 = dma.hbm_to_vmem [thread:$0]  %s229, 128, %s232, %s221
        $region24: #{tpu_custom_call.1} parent=15 // pred_fallthru
          _
        // Predicated region
        $region25: #{tpu_custom_call.1} parent=15 // pred_check
          %p235 = pneg %p115
        $region26: #{tpu_custom_call.1} parent=15 // pred_check_branch
          %237 = sbr.rel (%p235) target = $region28
        $region27: #{tpu_custom_call.1} parent=15 // pred_region
          %s238 = sand.u32 %s22, 1
          %s239 = scalar_lea.sflag [#allocation9], %s238
          %s240 = sand.u32 %s105, 1
          %s241 = smul.addr %s240, 8
          %s242 = scalar_lea.vmem [#allocation10], %s241
          %s244 = ssub.s32 128, 128
          %245 = vsyncadd %s239, %s244
          %s246 = smul.addr %s29, 128
          %s247 = scalar_lea.hbm %s2, %s246
          %s249 = sshll.u32 %s242, 4
          %s250 = int_to_ptr.vmem [resolvable:$true] %s249
          %252 = dma.hbm_to_vmem [thread:$0]  %s247, 128, %s250, %s239
        $region28: #{tpu_custom_call.1} parent=15 // pred_fallthru
          _
        // Predicated region
        $region29: #{tpu_custom_call.1} parent=15 // pred_check
          %p253 = pneg %p145
        $region30: #{tpu_custom_call.1} parent=15 // pred_check_branch
          %255 = sbr.rel (%p253) target = $region32
        $region31: #{tpu_custom_call.1} parent=15 // pred_region
          %s256 = sand.u32 %s135, 1
          %s257 = scalar_lea.sflag [#allocation12], %s256
          %s258 = sand.u32 %s135, 1
          %s259 = smul.addr %s258, 64
          %s260 = scalar_lea.vmem [#allocation11], %s259
          %s261 = smul.u32 8, %s31
          %s263 = ssub.s32 1024, 1024
          %264 = vsyncadd %s257, %s263
          %s265 = sadd.s32 %s30, %s261
          %s266 = smul.addr %s29, 8
          %s267 = sadd.s32 %s265, %s266
          %s268 = smul.addr %s267, 128
          %s269 = scalar_lea.hbm %s3, %s268
          %s270 = sshll.u32 %s260, 4
          %s271 = int_to_ptr.vmem [resolvable:$true] %s270
          %276 = dma.hbm_to_vmem [thread:$0]  %s269, 1024, %s271, %s257, 128, 128, 8
        $region32: #{tpu_custom_call.1} parent=15 // pred_fallthru
          _
      $region16: #{tpu_custom_call.1} parent=5 // pred_fallthru
        _
      %p277 = scmp.le.s32.totalorder 1, %s22
      %p278 = scmp.lt.s32.totalorder %s22, 3
      %p279 = pnand %p277, %p278
      %p280 = pneg %p279
      // Predicated region
      $region33: #{tpu_custom_call.1} parent=5 // pred_check
        _
      $region34: #{tpu_custom_call.1} parent=5 // pred_check_branch
        %282 = sbr.rel (%p279) target = $region36
      $region35: #{tpu_custom_call.1} parent=5 // pred_region
        %s283 = ssub.s32 %s22, 1
        %s284 = sand.u32 %s56, 1
        %s285 = scalar_lea.sflag [#allocation6], %s284
        %s286 = sand.u32 %s56, 1
        %s287 = smul.addr %s286, 8
        %s288 = scalar_lea.vmem [#allocation5], %s287
        // Predicated region
        $region37: #{tpu_custom_call.1} parent=35 // pred_check
          %p289 = pneg %p69
        $region38: #{tpu_custom_call.1} parent=35 // pred_check_branch
          %291 = sbr.rel (%p289) target = $region40
        $region39: #{tpu_custom_call.1} parent=35 // pred_region
          %292 = dma.done %s285, 128
        $region40: #{tpu_custom_call.1} parent=35 // pred_fallthru
          _
        %s293 = sand.u32 %s27, 1
        %s294 = scalar_lea.sflag [#allocation9], %s293
        %s295 = sand.u32 %s82, 1
        %s296 = smul.addr %s295, 8
        %s297 = scalar_lea.vmem [#allocation8], %s296
        // Predicated region
        $region41: #{tpu_custom_call.1} parent=35 // pred_check
          %p298 = pneg %p95
        $region42: #{tpu_custom_call.1} parent=35 // pred_check_branch
          %300 = sbr.rel (%p298) target = $region44
        $region43: #{tpu_custom_call.1} parent=35 // pred_region
          %301 = dma.done %s294, 128
        $region44: #{tpu_custom_call.1} parent=35 // pred_fallthru
          _
        %s302 = sand.u32 %s27, 1
        %s303 = scalar_lea.sflag [#allocation9], %s302
        %s304 = sand.u32 %s108, 1
        %s305 = smul.addr %s304, 8
        %s306 = scalar_lea.vmem [#allocation10], %s305
        // Predicated region
        $region45: #{tpu_custom_call.1} parent=35 // pred_check
          %p307 = pneg %p121
        $region46: #{tpu_custom_call.1} parent=35 // pred_check_branch
          %309 = sbr.rel (%p307) target = $region48
        $region47: #{tpu_custom_call.1} parent=35 // pred_region
          %310 = dma.done %s303, 128
        $region48: #{tpu_custom_call.1} parent=35 // pred_fallthru
          _
        %s311 = sand.u32 %s138, 1
        %s312 = scalar_lea.sflag [#allocation12], %s311
        %s313 = sand.u32 %s138, 1
        %s314 = smul.addr %s313, 64
        %s315 = scalar_lea.vmem [#allocation11], %s314
        // Predicated region
        $region49: #{tpu_custom_call.1} parent=35 // pred_check
          %p316 = pneg %p151
        $region50: #{tpu_custom_call.1} parent=35 // pred_check_branch
          %318 = sbr.rel (%p316) target = $region52
        $region51: #{tpu_custom_call.1} parent=35 // pred_region
          %319 = dma.done %s312, 1024
        $region52: #{tpu_custom_call.1} parent=35 // pred_fallthru
          _
        %s320 = sand.u32 %s56, 1
        %s321 = scalar_lea.sflag [#allocation6], %s320
        %s322 = sand.u32 %s56, 1
        %s323 = smul.addr %s322, 8
        %s324 = scalar_lea.vmem [#allocation5], %s323
        %p325 = pneg %p69
        %p326 = pneg %p66
        %s327 = sand.u32 %s27, 1
        %s328 = scalar_lea.sflag [#allocation9], %s327
        %s329 = sand.u32 %s82, 1
        %s330 = smul.addr %s329, 8
        %s331 = scalar_lea.vmem [#allocation8], %s330
        %p332 = pneg %p95
        %p333 = pneg %p92
        %s334 = sand.u32 %s27, 1
        %s335 = scalar_lea.sflag [#allocation9], %s334
        %s336 = sand.u32 %s108, 1
        %s337 = smul.addr %s336, 8
        %s338 = scalar_lea.vmem [#allocation10], %s337
        %p339 = pneg %p121
        %p340 = pneg %p118
        %s341 = sand.u32 %s138, 1
        %s342 = scalar_lea.sflag [#allocation12], %s341
        %s343 = sand.u32 %s138, 1
        %s344 = smul.addr %s343, 64
        %s345 = scalar_lea.vmem [#allocation11], %s344
        %p346 = pneg %p151
        %p347 = pneg %p148
        %p348 = pneg %p179
        %p349 = pneg %p176
        %s350 = sand.u32 %s166, 1
        %s351 = scalar_lea.sflag [#allocation7], %s350
        %s352 = sand.u32 %s166, 1
        %s353 = smul.addr %s352, 8
        %s354 = scalar_lea.vmem [#allocation13], %s353
        %s355 = smul.u32 8, %s34
        %v356 = vld [vmem:[%s288] sm:$0xff]
        %p357 = scmp.eq.s32.totalorder %s34, 0
        // Predicated region
        $region53: #{tpu_custom_call.1} parent=35 // pred_check
          %p358 = pneg %p357
        $region54: #{tpu_custom_call.1} parent=35 // pred_check_branch
          %360 = sbr.rel (%p358) target = $region56
        $region55: #{tpu_custom_call.1} parent=35 // pred_region
          %v361 = vld [vmem:[%s297] sm:$0xff]
          %vm362 = vcmask 261120
          %v364 = vsel %vm362, %v356, 0
          %v367 = vsel %vm362, %v361, 0
          %369 = vmatprep.subr.mxu0 0.0
          %370 = vmatpush1.xpose.msra.mxu0 %v367
          %371 = vmatprep.subr.mxu0 0.0
          %372 = vmatpush1.xpose.msra.mxu0 0.0
          %373 = vmatprep.subr.mxu0 0.0
          %374 = vmatpush1.xpose.msra.mxu0 0.0
          %375 = vmatprep.subr.mxu0 0.0
          %376 = vmatpush1.xpose.msra.mxu0 0.0
          %377 = vmatprep.subr.mxu0 0.0
          %378 = vmatpush1.xpose.msra.mxu0 0.0
          %379 = vmatprep.subr.mxu0 0.0
          %380 = vmatpush1.xpose.msra.mxu0 0.0
          %381 = vmatprep.subr.mxu0 0.0
          %382 = vmatpush1.xpose.msra.mxu0 0.0
          %383 = vmatprep.subr.mxu0 0.0
          %384 = vmatpush1.xpose.msra.mxu0 0.0
          %385 = vmatprep.subr.mxu0 0.0
          %386 = vmatpush1.xpose.msra.mxu0 0.0
          %387 = vmatprep.subr.mxu0 0.0
          %388 = vmatpush1.xpose.msra.mxu0 0.0
          %389 = vmatprep.subr.mxu0 0.0
          %390 = vmatpush1.xpose.msra.mxu0 0.0
          %391 = vmatprep.subr.mxu0 0.0
          %392 = vmatpush1.xpose.msra.mxu0 0.0
          %393 = vmatprep.subr.mxu0 0.0
          %394 = vmatpush1.xpose.msra.mxu0 0.0
          %395 = vmatprep.subr.mxu0 0.0
          %396 = vmatpush1.xpose.msra.mxu0 0.0
          %397 = vmatprep.subr.mxu0 0.0
          %398 = vmatpush1.xpose.msra.mxu0 0.0
          %399 = vmatprep.subr.mxu0 0.0
          %400 = vmatpush1.xpose.msra.mxu0 0.0
          %401 = vmatprep.subr.mxu0 0.0
          %402 = vmatpush1.xpose.msra.mxu0 0.0
          %403 = vmatprep.subr.mxu0 0.0
          %404 = vmatpush1.xpose.msra.mxu0 0.0
          %405 = vmatprep.subr.mxu0 0.0
          %406 = vmatpush1.xpose.msra.mxu0 0.0
          %407 = vmatprep.subr.mxu0 0.0
          %408 = vmatpush1.xpose.msra.mxu0 0.0
          %409 = vmatprep.subr.mxu0 0.0
          %410 = vmatpush1.xpose.msra.mxu0 0.0
          %411 = vmatprep.subr.mxu0 0.0
          %412 = vmatpush1.xpose.msra.mxu0 0.0
          %413 = vmatprep.subr.mxu0 0.0
          %414 = vmatpush1.xpose.msra.mxu0 0.0
          %415 = vmatprep.subr.mxu0 0.0
          %416 = vmatpush1.xpose.msra.mxu0 0.0
          %417 = vmatprep.subr.mxu0 0.0
          %418 = vmatpush1.xpose.msra.mxu0 0.0
          %419 = vmatprep.subr.mxu0 0.0
          %420 = vmatpush1.xpose.msra.mxu0 0.0
          %421 = vmatprep.subr.mxu0 0.0
          %422 = vmatpush1.xpose.msra.mxu0 0.0
          %423 = vmatprep.subr.mxu0 0.0
          %424 = vmatpush1.xpose.msra.mxu0 0.0
          %425 = vmatprep.subr.mxu0 0.0
          %426 = vmatpush1.xpose.msra.mxu0 0.0
          %427 = vmatprep.subr.mxu0 0.0
          %428 = vmatpush1.xpose.msra.mxu0 0.0
          %429 = vmatprep.subr.mxu0 0.0
          %430 = vmatpush1.xpose.msra.mxu0 0.0
          %431 = vmatprep.subr.mxu0 0.0
          %432 = vmatpush1.xpose.msra.mxu0 0.0
          %433 = vmatprep.mubr.f32.mxu0 0.0
          %434 = vmatmul.mubr.f32.gmra.mrb[0].mxu0 %v364
          %v435 = vpop.f32.mrb[0].mxu0
          %v436 = vadd.f32 0.0, %v435
          %v437 = vpop.f32.mrb[0].mxu0
          %438 = vdwg.mxu0
          %v439 = vmul.f32 %v436, 0.17677669
          %vm440 = vcmask 64512
          %v441 = vsel %vm440, %v439, -inf
          %442 = vmax.xlane.f32.xlu0 %v441
          %v443 = vpop.xlane.xlu0 %442
          %v444 = vsub.f32 %v439, %v443
          %v445 = vmul.f32 %v444, 1.442695
          %v446 = vpow.pop %v445
          %v447 = vsel %vm440, %v446, 0.0
          %448 = vadd.xlane.f32.xlu0 %v447
          %v449 = vpop.xlane.xlu0 %448
          %v450 = vrcp.pop %v449
          %v451 = vmul.f32 1.0, %v450
          %vm452 = vcmask 7168
          %453 = vst.msk [vmem:[#allocation3] sm:$0xff] %vm452, %v443
          %454 = vst.msk [vmem:[#allocation4] sm:$0xff] %vm452, %v451
          %v455 = vmul.f32 %v446, %v451
          %v456 = vld [vmem:[%s306] sm:$0xff]
          %v458 = vsel %vm440, %v455, 0
          %460 = vmatprep.subr.mxu0 0.0
          %461 = vmatpush1.msra.mxu0 %v456
          %462 = vmatprep.subr.mxu0 0.0
          %463 = vmatpush1.msra.mxu0 0.0
          %464 = vmatprep.subr.mxu0 0.0
          %465 = vmatpush1.msra.mxu0 0.0
          %466 = vmatprep.subr.mxu0 0.0
          %467 = vmatpush1.msra.mxu0 0.0
          %468 = vmatprep.subr.mxu0 0.0
          %469 = vmatpush1.msra.mxu0 0.0
          %470 = vmatprep.subr.mxu0 0.0
          %471 = vmatpush1.msra.mxu0 0.0
          %472 = vmatprep.subr.mxu0 0.0
          %473 = vmatpush1.msra.mxu0 0.0
          %474 = vmatprep.subr.mxu0 0.0
          %475 = vmatpush1.msra.mxu0 0.0
          %476 = vmatprep.subr.mxu0 0.0
          %477 = vmatpush1.msra.mxu0 0.0
          %478 = vmatprep.subr.mxu0 0.0
          %479 = vmatpush1.msra.mxu0 0.0
          %480 = vmatprep.subr.mxu0 0.0
          %481 = vmatpush1.msra.mxu0 0.0
          %482 = vmatprep.subr.mxu0 0.0
          %483 = vmatpush1.msra.mxu0 0.0
          %484 = vmatprep.subr.mxu0 0.0
          %485 = vmatpush1.msra.mxu0 0.0
          %486 = vmatprep.subr.mxu0 0.0
          %487 = vmatpush1.msra.mxu0 0.0
          %488 = vmatprep.subr.mxu0 0.0
          %489 = vmatpush1.msra.mxu0 0.0
          %490 = vmatprep.subr.mxu0 0.0
          %491 = vmatpush1.msra.mxu0 0.0
          %492 = vmatprep.subr.mxu0 0.0
          %493 = vmatpush1.msra.mxu0 0.0
          %494 = vmatprep.subr.mxu0 0.0
          %495 = vmatpush1.msra.mxu0 0.0
          %496 = vmatprep.subr.mxu0 0.0
          %497 = vmatpush1.msra.mxu0 0.0
          %498 = vmatprep.subr.mxu0 0.0
          %499 = vmatpush1.msra.mxu0 0.0
          %500 = vmatprep.subr.mxu0 0.0
          %501 = vmatpush1.msra.mxu0 0.0
          %502 = vmatprep.subr.mxu0 0.0
          %503 = vmatpush1.msra.mxu0 0.0
          %504 = vmatprep.subr.mxu0 0.0
          %505 = vmatpush1.msra.mxu0 0.0
          %506 = vmatprep.subr.mxu0 0.0
          %507 = vmatpush1.msra.mxu0 0.0
          %508 = vmatprep.subr.mxu0 0.0
          %509 = vmatpush1.msra.mxu0 0.0
          %510 = vmatprep.subr.mxu0 0.0
          %511 = vmatpush1.msra.mxu0 0.0
          %512 = vmatprep.subr.mxu0 0.0
          %513 = vmatpush1.msra.mxu0 0.0
          %514 = vmatprep.subr.mxu0 0.0
          %515 = vmatpush1.msra.mxu0 0.0
          %516 = vmatprep.subr.mxu0 0.0
          %517 = vmatpush1.msra.mxu0 0.0
          %518 = vmatprep.subr.mxu0 0.0
          %519 = vmatpush1.msra.mxu0 0.0
          %520 = vmatprep.subr.mxu0 0.0
          %521 = vmatpush1.msra.mxu0 0.0
          %522 = vmatprep.subr.mxu0 0.0
          %523 = vmatpush1.msra.mxu0 0.0
          %524 = vmatprep.mubr.f32.mxu0 0.0
          %525 = vmatmul.mubr.f32.gmra.mrb[0].mxu0 %v458
          %v526 = vpop.f32.mrb[0].mxu0
          %v527 = vadd.f32 0.0, %v526
          %v528 = vpop.f32.mrb[0].mxu0
          %529 = vdwg.mxu0
          %530 = vst.msk [vmem:[#allocation2] sm:$0xff] %vm362, %v527
        $region56: #{tpu_custom_call.1} parent=35 // pred_fallthru
          _
        %v531 = vld [vmem:[#allocation3] sm:$0xff]
        %v532 = vld [vmem:[#allocation4] sm:$0xff]
        %s533 = smul.u32 %s34, 8
        %s534 = scalar_lea.vmem %s297, %s533 [#allocation8]
        %v535 = vld [vmem:[%s534] sm:$0xff]
        %vm536 = vcmask 261120
        %v538 = vsel %vm536, %v356, 0
        %v541 = vsel %vm536, %v535, 0
        %543 = vmatprep.subr.mxu0 0.0
        %544 = vmatpush1.xpose.msra.mxu0 %v541
        %545 = vmatprep.subr.mxu0 0.0
        %546 = vmatpush1.xpose.msra.mxu0 0.0
        %547 = vmatprep.subr.mxu0 0.0
        %548 = vmatpush1.xpose.msra.mxu0 0.0
        %549 = vmatprep.subr.mxu0 0.0
        %550 = vmatpush1.xpose.msra.mxu0 0.0
        %551 = vmatprep.subr.mxu0 0.0
        %552 = vmatpush1.xpose.msra.mxu0 0.0
        %553 = vmatprep.subr.mxu0 0.0
        %554 = vmatpush1.xpose.msra.mxu0 0.0
        %555 = vmatprep.subr.mxu0 0.0
        %556 = vmatpush1.xpose.msra.mxu0 0.0
        %557 = vmatprep.subr.mxu0 0.0
        %558 = vmatpush1.xpose.msra.mxu0 0.0
        %559 = vmatprep.subr.mxu0 0.0
        %560 = vmatpush1.xpose.msra.mxu0 0.0
        %561 = vmatprep.subr.mxu0 0.0
        %562 = vmatpush1.xpose.msra.mxu0 0.0
        %563 = vmatprep.subr.mxu0 0.0
        %564 = vmatpush1.xpose.msra.mxu0 0.0
        %565 = vmatprep.subr.mxu0 0.0
        %566 = vmatpush1.xpose.msra.mxu0 0.0
        %567 = vmatprep.subr.mxu0 0.0
        %568 = vmatpush1.xpose.msra.mxu0 0.0
        %569 = vmatprep.subr.mxu0 0.0
        %570 = vmatpush1.xpose.msra.mxu0 0.0
        %571 = vmatprep.subr.mxu0 0.0
        %572 = vmatpush1.xpose.msra.mxu0 0.0
        %573 = vmatprep.subr.mxu0 0.0
        %574 = vmatpush1.xpose.msra.mxu0 0.0
        %575 = vmatprep.subr.mxu0 0.0
        %576 = vmatpush1.xpose.msra.mxu0 0.0
        %577 = vmatprep.subr.mxu0 0.0
        %578 = vmatpush1.xpose.msra.mxu0 0.0
        %579 = vmatprep.subr.mxu0 0.0
        %580 = vmatpush1.xpose.msra.mxu0 0.0
        %581 = vmatprep.subr.mxu0 0.0
        %582 = vmatpush1.xpose.msra.mxu0 0.0
        %583 = vmatprep.subr.mxu0 0.0
        %584 = vmatpush1.xpose.msra.mxu0 0.0
        %585 = vmatprep.subr.mxu0 0.0
        %586 = vmatpush1.xpose.msra.mxu0 0.0
        %587 = vmatprep.subr.mxu0 0.0
        %588 = vmatpush1.xpose.msra.mxu0 0.0
        %589 = vmatprep.subr.mxu0 0.0
        %590 = vmatpush1.xpose.msra.mxu0 0.0
        %591 = vmatprep.subr.mxu0 0.0
        %592 = vmatpush1.xpose.msra.mxu0 0.0
        %593 = vmatprep.subr.mxu0 0.0
        %594 = vmatpush1.xpose.msra.mxu0 0.0
        %595 = vmatprep.subr.mxu0 0.0
        %596 = vmatpush1.xpose.msra.mxu0 0.0
        %597 = vmatprep.subr.mxu0 0.0
        %598 = vmatpush1.xpose.msra.mxu0 0.0
        %599 = vmatprep.subr.mxu0 0.0
        %600 = vmatpush1.xpose.msra.mxu0 0.0
        %601 = vmatprep.subr.mxu0 0.0
        %602 = vmatpush1.xpose.msra.mxu0 0.0
        %603 = vmatprep.subr.mxu0 0.0
        %604 = vmatpush1.xpose.msra.mxu0 0.0
        %605 = vmatprep.subr.mxu0 0.0
        %606 = vmatpush1.xpose.msra.mxu0 0.0
        %607 = vmatprep.mubr.f32.mxu0 0.0
        %608 = vmatmul.mubr.f32.gmra.mrb[0].mxu0 %v538
        %v609 = vpop.f32.mrb[0].mxu0
        %v610 = vadd.f32 0.0, %v609
        %v611 = vpop.f32.mrb[0].mxu0
        %612 = vdwg.mxu0
        %v613 = vmul.f32 %v610, 0.17677669
        %615 = vset.pattern.permute.xlu0 0
        %616 = vperm.xlu0 %615, %v531
        %v617 = vpop.permute.xlu0 %616
        %v619 = vsub.f32 %v613, %v617
        %v620 = vmul.f32 %v619, 1.442695
        %v621 = vpow.pop %v620
        %623 = vset.pattern.permute.xlu0 0
        %624 = vperm.xlu0 %623, %v532
        %v625 = vpop.permute.xlu0 %624
        %v627 = vmul.f32 %v621, %v625
        %v628 = vld [vmem:[#allocation2] sm:$0xff]
        %v629 = vld [vmem:[%s315] sm:$0xff]
        %631 = vset.pattern.permute.xlu0 0
        %632 = vperm.xlu0 %631, %v627
        %v633 = vpop.permute.xlu0 %632
        %v635 = vmul.f32 %v633, %v629
        %v636 = vadd.f32 %v628, %v635
        %637 = vst.msk [vmem:[#allocation2] sm:$0xff] %vm536, %v636
        %v638 = vld [vmem:[#allocation2] sm:$0xff]
        %s639 = scalar_lea.vmem %s315, 8 [#allocation11]
        %v640 = vld [vmem:[%s639] sm:$0xff]
        %641 = vset.pattern.permute.xlu0 1
        %642 = vperm.xlu0 %641, %v627
        %v643 = vpop.permute.xlu0 %642
        %v645 = vmul.f32 %v643, %v640
        %v646 = vadd.f32 %v638, %v645
        %647 = vst.msk [vmem:[#allocation2] sm:$0xff] %vm536, %v646
        %v648 = vld [vmem:[#allocation2] sm:$0xff]
        %s649 = scalar_lea.vmem %s315, 16 [#allocation11]
        %v650 = vld [vmem:[%s649] sm:$0xff]
        %651 = vset.pattern.permute.xlu0 2
        %652 = vperm.xlu0 %651, %v627
        %v653 = vpop.permute.xlu0 %652
        %v655 = vmul.f32 %v653, %v650
        %v656 = vadd.f32 %v648, %v655
        %657 = vst.msk [vmem:[#allocation2] sm:$0xff] %vm536, %v656
        %v658 = vld [vmem:[#allocation2] sm:$0xff]
        %s659 = scalar_lea.vmem %s315, 24 [#allocation11]
        %v660 = vld [vmem:[%s659] sm:$0xff]
        %661 = vset.pattern.permute.xlu0 3
        %662 = vperm.xlu0 %661, %v627
        %v663 = vpop.permute.xlu0 %662
        %v665 = vmul.f32 %v663, %v660
        %v666 = vadd.f32 %v658, %v665
        %667 = vst.msk [vmem:[#allocation2] sm:$0xff] %vm536, %v666
        %v668 = vld [vmem:[#allocation2] sm:$0xff]
        %s669 = scalar_lea.vmem %s315, 32 [#allocation11]
        %v670 = vld [vmem:[%s669] sm:$0xff]
        %671 = vset.pattern.permute.xlu0 4
        %672 = vperm.xlu0 %671, %v627
        %v673 = vpop.permute.xlu0 %672
        %v675 = vmul.f32 %v673, %v670
        %v676 = vadd.f32 %v668, %v675
        %677 = vst.msk [vmem:[#allocation2] sm:$0xff] %vm536, %v676
        %v678 = vld [vmem:[#allocation2] sm:$0xff]
        %s679 = scalar_lea.vmem %s315, 40 [#allocation11]
        %v680 = vld [vmem:[%s679] sm:$0xff]
        %681 = vset.pattern.permute.xlu0 5
        %682 = vperm.xlu0 %681, %v627
        %v683 = vpop.permute.xlu0 %682
        %v685 = vmul.f32 %v683, %v680
        %v686 = vadd.f32 %v678, %v685
        %687 = vst.msk [vmem:[#allocation2] sm:$0xff] %vm536, %v686
        %v688 = vld [vmem:[#allocation2] sm:$0xff]
        %s689 = scalar_lea.vmem %s315, 48 [#allocation11]
        %v690 = vld [vmem:[%s689] sm:$0xff]
        %691 = vset.pattern.permute.xlu0 6
        %692 = vperm.xlu0 %691, %v627
        %v693 = vpop.permute.xlu0 %692
        %v695 = vmul.f32 %v693, %v690
        %v696 = vadd.f32 %v688, %v695
        %697 = vst.msk [vmem:[#allocation2] sm:$0xff] %vm536, %v696
        %v698 = vld [vmem:[#allocation2] sm:$0xff]
        %s699 = scalar_lea.vmem %s315, 56 [#allocation11]
        %v700 = vld [vmem:[%s699] sm:$0xff]
        %701 = vset.pattern.permute.xlu0 7
        %702 = vperm.xlu0 %701, %v627
        %v703 = vpop.permute.xlu0 %702
        %v705 = vmul.f32 %v703, %v700
        %v706 = vadd.f32 %v698, %v705
        %707 = vst.msk [vmem:[#allocation2] sm:$0xff] %vm536, %v706
        // Predicated region
        $region57: #{tpu_custom_call.1} parent=35 // pred_check
          %p708 = pneg %p357
        $region58: #{tpu_custom_call.1} parent=35 // pred_check_branch
          %710 = sbr.rel (%p708) target = $region60
        $region59: #{tpu_custom_call.1} parent=35 // pred_region
          %v711 = vld [vmem:[#allocation2] sm:$0xff]
          %712 = vst.msk [vmem:[%s354] sm:$0xff] %vm536, %v711
        $region60: #{tpu_custom_call.1} parent=35 // pred_fallthru
          _
        %s713 = sand.u32 %s166, 1
        %s714 = scalar_lea.sflag [#allocation7], %s713
        %s715 = sand.u32 %s166, 1
        %s716 = smul.addr %s715, 8
        %s717 = scalar_lea.vmem [#allocation13], %s716
        // Predicated region
        $region61: #{tpu_custom_call.1} parent=35 // pred_check
          %p718 = pneg %p176
        $region62: #{tpu_custom_call.1} parent=35 // pred_check_branch
          %720 = sbr.rel (%p718) target = $region64
        $region63: #{tpu_custom_call.1} parent=35 // pred_region
          %s722 = ssub.s32 128, 128
          %723 = vsyncadd %s714, %s722
          %s724 = sadd.s32 %s33, %s32
          %s725 = smul.addr %s724, 128
          %s726 = scalar_lea.hbm %s4, %s725
          %s728 = sshll.u32 %s717, 4
          %s729 = int_to_ptr.vmem [resolvable:$true] %s728
          %731 = dma.vmem_to_hbm [thread:$0]  %s729, 128, %s726, %s714
        $region64: #{tpu_custom_call.1} parent=35 // pred_fallthru
          _
      $region36: #{tpu_custom_call.1} parent=5 // pred_fallthru
        _
      %p732 = scmp.le.s32.totalorder 2, %s22
      // Predicated region
      $region65: #{tpu_custom_call.1} parent=5 // pred_check
        %p733 = pneg %p732
      $region66: #{tpu_custom_call.1} parent=5 // pred_check_branch
        %735 = sbr.rel (%p733) target = $region68
      $region67: #{tpu_custom_call.1} parent=5 // pred_region
        %s736 = ssub.s32 %s22, 2
        // Predicated region
        $region69: #{tpu_custom_call.1} parent=67 // pred_check
          %p737 = pneg %p182
        $region70: #{tpu_custom_call.1} parent=67 // pred_check_branch
          %739 = sbr.rel (%p737) target = $region72
        $region71: #{tpu_custom_call.1} parent=67 // pred_region
          %s740 = sand.u32 %s167, 1
          %s741 = scalar_lea.sflag [#allocation7], %s740
          %s742 = sand.u32 %s167, 1
          %s743 = smul.addr %s742, 8
          %s744 = scalar_lea.vmem [#allocation13], %s743
          %745 = dma.done %s741, 128
        $region72: #{tpu_custom_call.1} parent=67 // pred_fallthru
          _
      $region68: #{tpu_custom_call.1} parent=5 // pred_fallthru
        _
    $region6: #{tpu_custom_call.1} parent=1 // loop_footer
      %s26 = sadd.s32 1, %s22
    $region7: #{tpu_custom_call.1} parent=1 // loop_footer_branch
      %21 = sbr.rel target = $region3
    $region8: #{tpu_custom_call.1} parent=1 // loop_exit
      _
    %746 = vsyncpa [#allocation6], 1
    %s747 = scalar_lea.sflag [#allocation6], 1
    %748 = vsyncpa %s747, 1
    %749 = vsyncpa [#allocation9], 1
    %s750 = scalar_lea.sflag [#allocation9], 1
    %751 = vsyncpa %s750, 1
    %752 = vsyncpa [#allocation12], 1
    %s753 = scalar_lea.sflag [#allocation12], 1
    %754 = vsyncpa %s753, 1
    %755 = vsyncpa [#allocation7], 1
    %s756 = scalar_lea.sflag [#allocation7], 1
    %757 = vsyncpa %s756, 1

</llo_original>
